<compile_context>
chip_gen: v6e
topology: v6e:2x2x1
jax: 0.10.0
libtpu: 0.0.40
codegen_flags: <defaults>
</compile_context>

<pallas_src>
import numpy as np
import jax
import jax.numpy as jnp
from jax import lax
from jax.experimental import pallas as pl
from jax.experimental.pallas import tpu as pltpu

# ---------------- synthetic, deterministic "config" ----------------
ROOT_POS_DIM   = 3
POS_DIM        = 24          # 8 joints * 3 coords
CONTACT_DIM    = 4
VELOCITY_DIM   = 3
VEL_FACTOR_DIM = 2
LEFT_FOOT      = (3, 4)      # joint indices
RIGHT_FOOT     = (6, 7)

P            = POS_DIM + ROOT_POS_DIM                        # 27
CONTACT_LOC  = CONTACT_DIM + VELOCITY_DIM + VEL_FACTOR_DIM   # 9
FOOT_JOINTS  = LEFT_FOOT + RIGHT_FOOT                        # (l0, l1, r0, r1)
N_FEET       = len(FOOT_JOINTS)                              # 4

D_PRED = P + CONTACT_DIM + VELOCITY_DIM                      # 34 (predict_seq features)
D_STAT = D_PRED + VEL_FACTOR_DIM                             # 36 (mean/std features)

_MAX_TILE_T = 8192                  # frames per grid step (~8 MiB double-buffered VMEM)
_VMEM_LIMIT = 32 * 1024 * 1024      # safe on v5e / v6e / v7x


def _round_up(x, m):
    return -(-x // m) * m


def contact_loss(predict_seq, train_x1, train_x2, mean, std, *,
                 max_tile_t=_MAX_TILE_T):
    """Pallas implementation of ContactLoss.forward."""
    del train_x2  # unused by the PyTorch forward as well
    B, T, D = predict_seq.shape
    assert D == D_PRED
    f32 = jnp.float32

    # --- time tiling: large tiles, but keep >=2 grid steps when possible (v7x megacore)
    tile_t = min(_round_up(T, 8), _round_up(max_tile_t, 8))
    if B * pl.cdiv(T, tile_t) < 2 and T > 8:
        tile_t = max(8, _round_up(pl.cdiv(T, 2), 8))
    n_t = pl.cdiv(T, tile_t)

    # --- tiny boundary-frame slab: the "previous frame" for row 0 of every time tile.
    # Tile 0 differences against the (normalized) initial pose from train_x1; tile i>0
    # against the last frame of tile i-1.  Only the foot-coordinate lanes are ever read
    # from it (the selection matmul zeroes everything else).  ~B*n_t*34 floats total.
    init = train_x1[:, :1, :D_PRED]                                     # (B, 1, 34)
    if n_t > 1:
        bnd = predict_seq[:, tile_t - 1:(n_t - 1) * tile_t:tile_t, :]   # (B, n_t-1, 34)
        boundary = jnp.concatenate([init.astype(predict_seq.dtype), bnd], axis=1)
    else:
        boundary = init
    boundary = boundary.reshape(B, n_t, 1, D_PRED)

    # --- tiny constants ----------------------------------------------------------------
    sel_np = np.zeros((D_PRED, N_FEET), np.float32)   # 0/1 foot-coordinate selector
    for f, j in enumerate(FOOT_JOINTS):
        sel_np[j * 3:j * 3 + 3, f] = 1.0
    sel = jnp.asarray(sel_np)
    std_pos = std.astype(f32)[:D_PRED].reshape(1, D_PRED)     # only lanes < 27 matter
    std_c = std.astype(f32)[-CONTACT_LOC:-(VELOCITY_DIM + VEL_FACTOR_DIM)]
    std_c = std_c.reshape(1, CONTACT_DIM)
    mean_c = mean.astype(f32)[-CONTACT_LOC:-(VELOCITY_DIM + VEL_FACTOR_DIM)]
    mean_c = mean_c.reshape(1, CONTACT_DIM)

    def kernel(x_ref, pb_ref, stdp_ref, sel_ref, stdc_ref, meanc_ref, out_ref):
        ti = pl.program_id(1)
        x = x_ref[0].astype(f32)                       # (tile_t, 34)  current frames
        pb = pb_ref[0, 0].astype(f32)                  # (1, 34)       boundary frame

        # previous frame: shift the time (sublane) axis down by one (XLU roll) and
        # overwrite row 0 with this tile's boundary frame.
        rolled = pltpu.roll(x, 1, 0)
        row = lax.broadcasted_iota(jnp.int32, (tile_t, D_PRED), 0)
        prev = jnp.where(row == 0, jnp.broadcast_to(pb, (tile_t, D_PRED)), rolled)

        # de-normalized finite difference; the mean term cancels exactly:
        # (x1*s+m) - (x0*s+m) == (x1-x0)*s
        e = (x - prev) * stdp_ref[...]                 # (tile_t, 34)

        # per-foot squared velocity: sum of 3 coord diffs^2 per foot, as one small
        # 0/1 selection matmul on the otherwise idle MXU.
        vel = jnp.dot(e * e, sel_ref[...],
                      preferred_element_type=f32,
                      precision=lax.Precision.HIGHEST)  # (tile_t, 4)

        # de-normalized |contact| from a static 4-lane slice of the loaded block.
        fc = jnp.abs(x[:, P:P + CONTACT_DIM] * stdc_ref[...] + meanc_ref[...])

        # mask rows past the true sequence length (partial edge tiles / padding).
        t_idx = ti * tile_t + lax.broadcasted_iota(jnp.int32, (tile_t, N_FEET), 0)
        contrib = jnp.where(t_idx < T, fc * vel, 0.0)   # (tile_t, 4)

        s = jnp.sum(contrib, axis=1, keepdims=True)     # lane reduce   -> (tile_t, 1)
        s = jnp.sum(s, axis=0, keepdims=True)           # sublane reduce -> (1, 1)
        out_ref[...] = s.reshape(1, 1, 1, 1)            # per-step partial sum

    partials = pl.pallas_call(
        kernel,
        out_shape=jax.ShapeDtypeStruct((B, n_t, 1, 1), f32),
        grid_spec=pltpu.PrefetchScalarGridSpec(
            num_scalar_prefetch=0,
            grid=(B, n_t),
            in_specs=[
                pl.BlockSpec((1, tile_t, D_PRED), lambda b, t: (b, t, 0)),
                pl.BlockSpec((1, 1, 1, D_PRED), lambda b, t: (b, t, 0, 0)),
                pl.BlockSpec((1, D_PRED), lambda b, t: (0, 0)),
                pl.BlockSpec((D_PRED, N_FEET), lambda b, t: (0, 0)),
                pl.BlockSpec((1, CONTACT_DIM), lambda b, t: (0, 0)),
                pl.BlockSpec((1, CONTACT_DIM), lambda b, t: (0, 0)),
            ],
            out_specs=pl.BlockSpec((1, 1, 1, 1), lambda b, t: (b, t, 0, 0)),
        ),
        compiler_params=pltpu.CompilerParams(
            dimension_semantics=("parallel", "parallel"),
            vmem_limit_bytes=_VMEM_LIMIT),
    )(predict_seq, boundary, std_pos, sel, std_c, mean_c)

    # mean over batch, times 2
    return jnp.sum(partials) * (2.0 / B)


# ---------------- pure-JAX reference (mirrors the PyTorch forward) ----------------
def contact_loss_ref(predict_seq, train_x1, train_x2, mean, std):
    del train_x2
    init_pos = train_x1[:, 0, :P]
    src_pos_seq = predict_seq[..., :P] * std[:P] + mean[:P]
    src_init_pos = init_pos * std[:P] + mean[:P]
    temp = jnp.concatenate([src_init_pos[:, None, :], src_pos_seq], axis=1)
    vels = []
    for j in FOOT_JOINTS:
        v = jnp.sum((temp[:, 1:, j * 3:j * 3 + 3] - temp[:, :-1, j * 3:j * 3 + 3]) ** 2,
                    axis=-1, keepdims=True)
        vels.append(v)
    feet_vels = jnp.concatenate(vels, axis=-1)
    feet_contact = jnp.abs(
        predict_seq[..., -(CONTACT_DIM + VELOCITY_DIM):-VELOCITY_DIM]
        * std[-CONTACT_LOC:-(VELOCITY_DIM + VEL_FACTOR_DIM)]
        + mean[-CONTACT_LOC:-(VELOCITY_DIM + VEL_FACTOR_DIM)])
    return jnp.mean(jnp.sum(jnp.sum(feet_contact * feet_vels, axis=-1), axis=-1)) * 2


# ---------------- main ----------------
if __name__ == "__main__":
    B, T = 2, 16
    key = jax.random.PRNGKey(0)
    k1, k2, k3, k4 = jax.random.split(key, 4)

    # deterministic "parameters" of the module (normalization statistics)
    _mean = jax.random.normal(k1, (D_STAT,), dtype=jnp.float32) * 0.1
    _std  = jax.random.uniform(k2, (D_STAT,), dtype=jnp.float32,
                               minval=0.5, maxval=1.5)

    predict_seq = jax.random.normal(k3, (B, T, D_PRED), dtype=jnp.float32)
    _train_x1   = jax.random.normal(k4, (B, T, D_STAT), dtype=jnp.float32)
    _train_x2   = jnp.zeros((B, T, D_STAT), dtype=jnp.float32)  # unused by forward

    loss = contact_loss(predict_seq, _train_x1, _train_x2, _mean, _std)
    jax.block_until_ready(loss)
    ref = contact_loss_ref(predict_seq, _train_x1, _train_x2, _mean, _std)
    # tolerance covers MXU f32 multi-pass rounding in the tiny selection matmul
    assert np.allclose(np.asarray(loss), np.asarray(ref), rtol=2e-3, atol=1e-3), (
        f"mismatch: pallas={float(loss)} ref={float(ref)}")

    # also exercise multiple time tiles + a masked partial edge tile + tile boundaries
    Tb = 13
    loss2 = contact_loss(predict_seq[:, :Tb], _train_x1[:, :Tb], _train_x2[:, :Tb],
                         _mean, _std, max_tile_t=8)
    jax.block_until_ready(loss2)
    ref2 = contact_loss_ref(predict_seq[:, :Tb], _train_x1[:, :Tb], _train_x2[:, :Tb],
                            _mean, _std)
    assert np.allclose(np.asarray(loss2), np.asarray(ref2), rtol=2e-3, atol=1e-3), (
        f"mismatch (tiled): pallas={float(loss2)} ref={float(ref2)}")

    print("KERNEL_OK")
</pallas_src>

<mosaic_0001>
module attributes {stable_mosaic.version = 11 : i64} {
  func.func @kernel(%arg0: i32, %arg1: i32, %arg2: memref<1x16x34xf32, #tpu.memory_space<vmem>>, %arg3: memref<1x1x1x34xf32, #tpu.memory_space<vmem>>, %arg4: memref<1x34xf32, #tpu.memory_space<vmem>>, %arg5: memref<34x4xf32, #tpu.memory_space<vmem>>, %arg6: memref<1x4xf32, #tpu.memory_space<vmem>>, %arg7: memref<1x4xf32, #tpu.memory_space<vmem>>, %arg8: memref<1x1x1x1xf32, #tpu.memory_space<vmem>>) attributes {dimension_semantics = [#tpu.dimension_semantics<parallel>, #tpu.dimension_semantics<parallel>], iteration_bounds = array<i64: 2, 1>, scalar_prefetch = 0 : i64, scratch_operands = 0 : i64, tpu.core_type = #tpu.core_type<tc>, window_params = [{transform_indices = @transform_0, window_bounds = array<i64: 1, 16, 34>}, {transform_indices = @transform_1, window_bounds = array<i64: 1, 1, 1, 34>}, {pipeline_mode = #tpu.pipeline_mode<synchronous>, transform_indices = @transform_2, window_bounds = array<i64: 1, 34>}, {pipeline_mode = #tpu.pipeline_mode<synchronous>, transform_indices = @transform_3, window_bounds = array<i64: 34, 4>}, {pipeline_mode = #tpu.pipeline_mode<synchronous>, transform_indices = @transform_4, window_bounds = array<i64: 1, 4>}, {pipeline_mode = #tpu.pipeline_mode<synchronous>, transform_indices = @transform_5, window_bounds = array<i64: 1, 4>}, {transform_indices = @transform_6, window_bounds = array<i64: 1, 1, 1, 1>}]} {
    %c0 = arith.constant 0 : index
    %c0_0 = arith.constant 0 : index
    %c0_1 = arith.constant 0 : index
    %0 = vector.load %arg2[%c0, %c0_0, %c0_1] : memref<1x16x34xf32, #tpu.memory_space<vmem>>, vector<1x16x34xf32>
    %1 = vector.shape_cast %0 : vector<1x16x34xf32> to vector<16x34xf32>
    %c0_2 = arith.constant 0 : index
    %c0_3 = arith.constant 0 : index
    %c0_4 = arith.constant 0 : index
    %c0_5 = arith.constant 0 : index
    %2 = vector.load %arg3[%c0_2, %c0_3, %c0_4, %c0_5] : memref<1x1x1x34xf32, #tpu.memory_space<vmem>>, vector<1x1x1x34xf32>
    %3 = vector.shape_cast %2 : vector<1x1x1x34xf32> to vector<1x34xf32>
    %c1_i32 = arith.constant 1 : i32
    %4 = tpu.dynamic_rotate %1 by %c1_i32 dim 0 : vector<16x34xf32>, i32 -> vector<16x34xf32>
    %5 = tpu.iota {dimensions = array<i32: 0>} : vector<16x34xi32>
    %c0_i32 = arith.constant 0 : i32
    %6 = vector.broadcast %c0_i32 : i32 to vector<16x34xi32>
    %7 = arith.cmpi eq, %5, %6 : vector<16x34xi32>
    %8 = vector.shape_cast %3 : vector<1x34xf32> to vector<1x34xf32>
    %9 = vector.broadcast %8 : vector<1x34xf32> to vector<16x34xf32>
    %10 = arith.select %7, %9, %4 : vector<16x34xi1>, vector<16x34xf32>
    %11 = arith.subf %1, %10 : vector<16x34xf32>
    %c0_6 = arith.constant 0 : index
    %c0_7 = arith.constant 0 : index
    %12 = vector.load %arg4[%c0_6, %c0_7] : memref<1x34xf32, #tpu.memory_space<vmem>>, vector<1x34xf32>
    %13 = vector.broadcast %12 : vector<1x34xf32> to vector<16x34xf32>
    %14 = arith.mulf %11, %13 : vector<16x34xf32>
    %15 = arith.mulf %14, %14 : vector<16x34xf32>
    %c0_8 = arith.constant 0 : index
    %c0_9 = arith.constant 0 : index
    %16 = vector.load %arg5[%c0_8, %c0_9] : memref<34x4xf32, #tpu.memory_space<vmem>>, vector<34x4xf32>
    %cst = arith.constant dense<0.000000e+00> : vector<16x4xf32>
    %17 = tpu.matmul %15, %16, %cst {dimension_numbers = #tpu.dot_dimension_numbers<[1], [0], [0], [1], [0, 0, 1, 1], [], []>, precision = #tpu.contract_precision<fp32>} : vector<16x34xf32>, vector<34x4xf32>, vector<16x4xf32> -> vector<16x4xf32>
    %18 = vector.extract_strided_slice %1 {offsets = [0, 27], sizes = [16, 4], strides = [1, 1]} : vector<16x34xf32> to vector<16x4xf32>
    %c0_10 = arith.constant 0 : index
    %c0_11 = arith.constant 0 : index
    %19 = vector.load %arg6[%c0_10, %c0_11] : memref<1x4xf32, #tpu.memory_space<vmem>>, vector<1x4xf32>
    %20 = vector.broadcast %19 : vector<1x4xf32> to vector<16x4xf32>
    %21 = arith.mulf %18, %20 : vector<16x4xf32>
    %c0_12 = arith.constant 0 : index
    %c0_13 = arith.constant 0 : index
    %22 = vector.load %arg7[%c0_12, %c0_13] : memref<1x4xf32, #tpu.memory_space<vmem>>, vector<1x4xf32>
    %23 = vector.broadcast %22 : vector<1x4xf32> to vector<16x4xf32>
    %24 = arith.addf %21, %23 : vector<16x4xf32>
    %25 = math.absf %24 : vector<16x4xf32>
    %c16_i32 = arith.constant 16 : i32
    %26 = arith.muli %arg1, %c16_i32 : i32
    %27 = tpu.iota {dimensions = array<i32: 0>} : vector<16x4xi32>
    %28 = vector.broadcast %26 : i32 to vector<16x4xi32>
    %29 = arith.addi %28, %27 : vector<16x4xi32>
    %c16_i32_14 = arith.constant 16 : i32
    %30 = vector.broadcast %c16_i32_14 : i32 to vector<16x4xi32>
    %31 = arith.cmpi slt, %29, %30 : vector<16x4xi32>
    %32 = arith.mulf %25, %17 : vector<16x4xf32>
    %cst_15 = arith.constant 0.000000e+00 : f32
    %33 = vector.broadcast %cst_15 : f32 to vector<16x4xf32>
    %34 = arith.select %31, %32, %33 : vector<16x4xi1>, vector<16x4xf32>
    %cst_16 = arith.constant dense<0.000000e+00> : vector<16xf32>
    %35 = vector.multi_reduction <add>, %34, %cst_16 [1] : vector<16x4xf32> to vector<16xf32>
    %36 = vector.shape_cast %35 : vector<16xf32> to vector<16x1xf32>
    %cst_17 = arith.constant dense<0.000000e+00> : vector<1xf32>
    %37 = vector.multi_reduction <add>, %36, %cst_17 [0] : vector<16x1xf32> to vector<1xf32>
    %38 = vector.shape_cast %37 : vector<1xf32> to vector<1x1xf32>
    %39 = vector.shape_cast %38 : vector<1x1xf32> to vector<1x1x1x1xf32>
    %c0_18 = arith.constant 0 : index
    %c0_19 = arith.constant 0 : index
    %c0_20 = arith.constant 0 : index
    %c0_21 = arith.constant 0 : index
    %40 = vector.load %arg8[%c0_18, %c0_19, %c0_20, %c0_21] : memref<1x1x1x1xf32, #tpu.memory_space<vmem>>, vector<1x1x1x1xf32>
    tpu.vector_store %arg8[%c0_18, %c0_19, %c0_20, %c0_21], %39 {strides = array<i32>} : memref<1x1x1x1xf32, #tpu.memory_space<vmem>>, vector<1x1x1x1xf32>,
    return
  }
  func.func @transform_0(%arg0: i32, %arg1: i32) -> (i32, i32, i32) {
    %c0_i32 = arith.constant 0 : i32
    %c0_i32_0 = arith.constant 0 : i32
    return %arg0, %arg1, %c0_i32 : i32, i32, i32
  }
  func.func @transform_1(%arg0: i32, %arg1: i32) -> (i32, i32, i32, i32) {
    %c0_i32 = arith.constant 0 : i32
    %c0_i32_0 = arith.constant 0 : i32
    %c0_i32_1 = arith.constant 0 : i32
    return %arg0, %arg1, %c0_i32, %c0_i32_0 : i32, i32, i32, i32
  }
  func.func @transform_2(%arg0: i32, %arg1: i32) -> (i32, i32) {
    %c0_i32 = arith.constant 0 : i32
    %c0_i32_0 = arith.constant 0 : i32
    %c0_i32_1 = arith.constant 0 : i32
    return %c0_i32, %c0_i32_0 : i32, i32
  }
  func.func @transform_3(%arg0: i32, %arg1: i32) -> (i32, i32) {
    %c0_i32 = arith.constant 0 : i32
    %c0_i32_0 = arith.constant 0 : i32
    %c0_i32_1 = arith.constant 0 : i32
    return %c0_i32, %c0_i32_0 : i32, i32
  }
  func.func @transform_4(%arg0: i32, %arg1: i32) -> (i32, i32) {
    %c0_i32 = arith.constant 0 : i32
    %c0_i32_0 = arith.constant 0 : i32
    %c0_i32_1 = arith.constant 0 : i32
    return %c0_i32, %c0_i32_0 : i32, i32
  }
  func.func @transform_5(%arg0: i32, %arg1: i32) -> (i32, i32) {
    %c0_i32 = arith.constant 0 : i32
    %c0_i32_0 = arith.constant 0 : i32
    %c0_i32_1 = arith.constant 0 : i32
    return %c0_i32, %c0_i32_0 : i32, i32
  }
  func.func @transform_6(%arg0: i32, %arg1: i32) -> (i32, i32, i32, i32) {
    %c0_i32 = arith.constant 0 : i32
    %c0_i32_0 = arith.constant 0 : i32
    %c0_i32_1 = arith.constant 0 : i32
    return %arg0, %arg1, %c0_i32, %c0_i32_0 : i32, i32, i32, i32
  }
}

</mosaic_0001>

<llo_original>
// kernel: tpu_custom_call.1
$region0: #{tpu_custom_call.1}
  #allocation0 [shape = 'u32[]', space=smem, size = 0x4, offset = 0x4, fixed_abs, tag = 'smem constant byte address 0x4 - core index']
  #allocation1 [shape = 'u32[144,128]{1,0:T(1,128)}', space=vmem, size = 0x12000, scoped, tag = 'internal scratch']
  %s0 = inlined_call_operand.vmem [shape: f32[2,16,34], index: 0, kind: input, shape index: {}]
  %s1 = inlined_call_operand.vmem [shape: f32[2,1,1,34], index: 1, kind: input, shape index: {}]
  %s2 = inlined_call_operand.vmem [shape: f32[1,34], index: 2, kind: input, shape index: {}]
  %s3 = inlined_call_operand.vmem [shape: f32[34,4], index: 3, kind: input, shape index: {}]
  %s4 = inlined_call_operand.vmem [shape: f32[1,4], index: 4, kind: input, shape index: {}]
  %s5 = inlined_call_operand.vmem [shape: f32[1,4], index: 5, kind: input, shape index: {}]
  %s6 = inlined_call_operand.vmem [shape: f32[2,1,1,1], index: 6, kind: output, shape index: {}]
  %s7 = sld [smem:[#allocation0]]
  $region57: #{tpu_custom_call.1} parent=0
    _
  %s9 = ssub.s32 1, %s7
  %s10 = scalar_select 0, %s9, %s7
  loop: start=0, step=1, limit=4
  $region2: #{tpu_custom_call.1} parent=0 // loop_pre_header
    _
  $region3: #{tpu_custom_call.1} parent=0 // loop_header
    %s12 = sphi 0, %s16
    %p13 = scmp.ge.s32.totalorder %s12, 4
    %s19 = sphi 0, %s31
    %s20 = sphi 0, %s27
    %s21 = sphi 0, %s19
    %s22 = sphi 0, %s20
    %s23 = sphi 0, %s21
    %s24 = sphi 0, %s22
    %s36 = sphi 0, %s38
    %s39 = sphi 0, %s36
    %s40 = sphi 0, %s39
    %s56 = sphi 0, %s40
    %s64 = sphi 0, %s66
    %s67 = sphi 0, %s64
    %s68 = sphi 0, %s67
    %s84 = sphi 0, %s68
    %s88 = sphi 0, %s88
    %s90 = sphi 0, %s88
    %s91 = sphi 0, %s90
    %s105 = sphi 0, %s91
    %s109 = sphi 0, %s109
    %s111 = sphi 0, %s109
    %s112 = sphi 0, %s111
    %s126 = sphi 0, %s112
    %s130 = sphi 0, %s130
    %s132 = sphi 0, %s130
    %s133 = sphi 0, %s132
    %s147 = sphi 0, %s133
    %s151 = sphi 0, %s151
    %s153 = sphi 0, %s151
    %s154 = sphi 0, %s153
    %s168 = sphi 0, %s154
    %s176 = sphi 0, %s178
    %s179 = sphi 0, %s176
    %s180 = sphi 0, %s179
    %s196 = sphi 0, %s180
  $region4: #{tpu_custom_call.1} parent=0 // loop_header_branch
    %15 = sbr.rel (%p13) target = $region8
  $region5: #{tpu_custom_call.1} parent=0 // loop_body
    %s17 = ssub.s32 %s12, 1
    %s18 = ssub.s32 %s12, 2
    %s25 = sadd.s32 1, %s20
    %p26 = scmp.ge.s32.totalorder %s25, 1
    %s27 = scalar_select %p26, 0, %s25
    %s28 = sadd.s32 1, %s19
    %s29 = scalar_select %p26, %s28, %s19
    %p30 = scmp.ge.s32.totalorder %s29, 2
    %s31 = scalar_select %p30, 0, %s29
    %s32 = ssub.s32 %s19, %s31
    %s33 = ssub.s32 %s20, %s27
    %s34 = sor.u32 %s32, %s33
    %p35 = scmp.eq.s32.totalorder %s34, 0
    %s37 = sadd.s32 %s36, 1
    %s38 = scalar_select %p35, %s36, %s37
    %p41 = pneg %p35
    %p42 = scmp.eq.s32.totalorder %s12, 1
    %p43 = por %p41, %p42
    %p44 = scmp.ne.s32.totalorder %s36, %s39
    %p45 = scmp.eq.s32.totalorder %s12, 0
    %p46 = por %p44, %p45
    %p47 = scmp.ne.s32.totalorder %s36, %s39
    %p48 = scmp.eq.s32.totalorder %s17, 1
    %p49 = por %p47, %p48
    %p50 = scmp.ne.s32.totalorder %s39, %s40
    %p51 = scmp.eq.s32.totalorder %s17, 0
    %p52 = por %p50, %p51
    %p53 = scmp.ne.s32.totalorder %s39, %s40
    %p54 = scmp.eq.s32.totalorder %s18, 1
    %p55 = por %p53, %p54
    %p57 = scmp.ne.s32.totalorder %s40, %s56
    %p58 = scmp.eq.s32.totalorder %s18, 0
    %p59 = por %p57, %p58
    %s60 = ssub.s32 %s19, %s31
    %s61 = ssub.s32 %s20, %s27
    %s62 = sor.u32 %s60, %s61
    %p63 = scmp.eq.s32.totalorder %s62, 0
    %s65 = sadd.s32 %s64, 1
    %s66 = scalar_select %p63, %s64, %s65
    %p69 = pneg %p63
    %p70 = scmp.eq.s32.totalorder %s12, 1
    %p71 = por %p69, %p70
    %p72 = scmp.ne.s32.totalorder %s64, %s67
    %p73 = scmp.eq.s32.totalorder %s12, 0
    %p74 = por %p72, %p73
    %p75 = scmp.ne.s32.totalorder %s64, %s67
    %p76 = scmp.eq.s32.totalorder %s17, 1
    %p77 = por %p75, %p76
    %p78 = scmp.ne.s32.totalorder %s67, %s68
    %p79 = scmp.eq.s32.totalorder %s17, 0
    %p80 = por %p78, %p79
    %p81 = scmp.ne.s32.totalorder %s67, %s68
    %p82 = scmp.eq.s32.totalorder %s18, 1
    %p83 = por %p81, %p82
    %p85 = scmp.ne.s32.totalorder %s68, %s84
    %p86 = scmp.eq.s32.totalorder %s18, 0
    %p87 = por %p85, %p86
    %s89 = sadd.s32 %s88, 1
    %p92 = scmp.eq.s32.totalorder %s12, 1
    %p93 = scmp.ne.s32.totalorder %s88, %s90
    %p94 = scmp.eq.s32.totalorder %s12, 0
    %p95 = por %p93, %p94
    %p96 = scmp.ne.s32.totalorder %s88, %s90
    %p97 = scmp.eq.s32.totalorder %s17, 1
    %p98 = por %p96, %p97
    %p99 = scmp.ne.s32.totalorder %s90, %s91
    %p100 = scmp.eq.s32.totalorder %s17, 0
    %p101 = por %p99, %p100
    %p102 = scmp.ne.s32.totalorder %s90, %s91
    %p103 = scmp.eq.s32.totalorder %s18, 1
    %p104 = por %p102, %p103
    %p106 = scmp.ne.s32.totalorder %s91, %s105
    %p107 = scmp.eq.s32.totalorder %s18, 0
    %p108 = por %p106, %p107
    %s110 = sadd.s32 %s109, 1
    %p113 = scmp.eq.s32.totalorder %s12, 1
    %p114 = scmp.ne.s32.totalorder %s109, %s111
    %p115 = scmp.eq.s32.totalorder %s12, 0
    %p116 = por %p114, %p115
    %p117 = scmp.ne.s32.totalorder %s109, %s111
    %p118 = scmp.eq.s32.totalorder %s17, 1
    %p119 = por %p117, %p118
    %p120 = scmp.ne.s32.totalorder %s111, %s112
    %p121 = scmp.eq.s32.totalorder %s17, 0
    %p122 = por %p120, %p121
    %p123 = scmp.ne.s32.totalorder %s111, %s112
    %p124 = scmp.eq.s32.totalorder %s18, 1
    %p125 = por %p123, %p124
    %p127 = scmp.ne.s32.totalorder %s112, %s126
    %p128 = scmp.eq.s32.totalorder %s18, 0
    %p129 = por %p127, %p128
    %s131 = sadd.s32 %s130, 1
    %p134 = scmp.eq.s32.totalorder %s12, 1
    %p135 = scmp.ne.s32.totalorder %s130, %s132
    %p136 = scmp.eq.s32.totalorder %s12, 0
    %p137 = por %p135, %p136
    %p138 = scmp.ne.s32.totalorder %s130, %s132
    %p139 = scmp.eq.s32.totalorder %s17, 1
    %p140 = por %p138, %p139
    %p141 = scmp.ne.s32.totalorder %s132, %s133
    %p142 = scmp.eq.s32.totalorder %s17, 0
    %p143 = por %p141, %p142
    %p144 = scmp.ne.s32.totalorder %s132, %s133
    %p145 = scmp.eq.s32.totalorder %s18, 1
    %p146 = por %p144, %p145
    %p148 = scmp.ne.s32.totalorder %s133, %s147
    %p149 = scmp.eq.s32.totalorder %s18, 0
    %p150 = por %p148, %p149
    %s152 = sadd.s32 %s151, 1
    %p155 = scmp.eq.s32.totalorder %s12, 1
    %p156 = scmp.ne.s32.totalorder %s151, %s153
    %p157 = scmp.eq.s32.totalorder %s12, 0
    %p158 = por %p156, %p157
    %p159 = scmp.ne.s32.totalorder %s151, %s153
    %p160 = scmp.eq.s32.totalorder %s17, 1
    %p161 = por %p159, %p160
    %p162 = scmp.ne.s32.totalorder %s153, %s154
    %p163 = scmp.eq.s32.totalorder %s17, 0
    %p164 = por %p162, %p163
    %p165 = scmp.ne.s32.totalorder %s153, %s154
    %p166 = scmp.eq.s32.totalorder %s18, 1
    %p167 = por %p165, %p166
    %p169 = scmp.ne.s32.totalorder %s154, %s168
    %p170 = scmp.eq.s32.totalorder %s18, 0
    %p171 = por %p169, %p170
    %s172 = ssub.s32 %s19, %s31
    %s173 = ssub.s32 %s20, %s27
    %s174 = sor.u32 %s172, %s173
    %p175 = scmp.eq.s32.totalorder %s174, 0
    %s177 = sadd.s32 %s176, 1
    %s178 = scalar_select %p175, %s176, %s177
    %p181 = pneg %p175
    %p182 = scmp.eq.s32.totalorder %s12, 1
    %p183 = por %p181, %p182
    %p184 = scmp.ne.s32.totalorder %s176, %s179
    %p185 = scmp.eq.s32.totalorder %s12, 0
    %p186 = por %p184, %p185
    %p187 = scmp.ne.s32.totalorder %s176, %s179
    %p188 = scmp.eq.s32.totalorder %s17, 1
    %p189 = por %p187, %p188
    %p190 = scmp.ne.s32.totalorder %s179, %s180
    %p191 = scmp.eq.s32.totalorder %s17, 0
    %p192 = por %p190, %p191
    %p193 = scmp.ne.s32.totalorder %s179, %s180
    %p194 = scmp.eq.s32.totalorder %s18, 1
    %p195 = por %p193, %p194
    %p197 = scmp.ne.s32.totalorder %s180, %s196
    %p198 = scmp.eq.s32.totalorder %s18, 0
    %p199 = por %p197, %p198
    %p200 = scmp.le.s32.totalorder 1, %s12
    %p201 = scmp.lt.s32.totalorder %s12, 3
    %p202 = pnand %p200, %p201
    %p203 = pneg %p202
    // Predicated region
    $region9: #{tpu_custom_call.1} parent=5 // pred_check
      _
    $region10: #{tpu_custom_call.1} parent=5 // pred_check_branch
      %205 = sbr.rel (%p202) target = $region12
    $region11: #{tpu_custom_call.1} parent=5 // pred_region
      %s206 = ssub.s32 %s12, 1
      // Predicated region
      $region13: #{tpu_custom_call.1} parent=11 // pred_check
        %p207 = pneg %p101
      $region14: #{tpu_custom_call.1} parent=11 // pred_check_branch
        %209 = sbr.rel (%p207) target = $region16
      $region15: #{tpu_custom_call.1} parent=11 // pred_region
        _
      $region16: #{tpu_custom_call.1} parent=11 // pred_fallthru
        _
      // Predicated region
      $region17: #{tpu_custom_call.1} parent=11 // pred_check
        %p210 = pneg %p122
      $region18: #{tpu_custom_call.1} parent=11 // pred_check_branch
        %212 = sbr.rel (%p210) target = $region20
      $region19: #{tpu_custom_call.1} parent=11 // pred_region
        _
      $region20: #{tpu_custom_call.1} parent=11 // pred_fallthru
        _
      // Predicated region
      $region21: #{tpu_custom_call.1} parent=11 // pred_check
        %p213 = pneg %p143
      $region22: #{tpu_custom_call.1} parent=11 // pred_check_branch
        %215 = sbr.rel (%p213) target = $region24
      $region23: #{tpu_custom_call.1} parent=11 // pred_region
        _
      $region24: #{tpu_custom_call.1} parent=11 // pred_fallthru
        _
      // Predicated region
      $region25: #{tpu_custom_call.1} parent=11 // pred_check
        %p216 = pneg %p164
      $region26: #{tpu_custom_call.1} parent=11 // pred_check_branch
        %218 = sbr.rel (%p216) target = $region28
      $region27: #{tpu_custom_call.1} parent=11 // pred_region
        _
      $region28: #{tpu_custom_call.1} parent=11 // pred_fallthru
        _
    $region12: #{tpu_custom_call.1} parent=5 // pred_fallthru
      _
    %p219 = scmp.lt.s32.totalorder %s12, 2
    // Predicated region
    $region29: #{tpu_custom_call.1} parent=5 // pred_check
      %p220 = pneg %p219
    $region30: #{tpu_custom_call.1} parent=5 // pred_check_branch
      %222 = sbr.rel (%p220) target = $region32
    $region31: #{tpu_custom_call.1} parent=5 // pred_region
      // Predicated region
      $region33: #{tpu_custom_call.1} parent=31 // pred_check
        %p223 = pneg %p46
      $region34: #{tpu_custom_call.1} parent=31 // pred_check_branch
        %225 = sbr.rel (%p223) target = $region36
      $region35: #{tpu_custom_call.1} parent=31 // pred_region
        %s226 = smul.u32 2, %s20
        %p227 = scmp.lt.s32.totalorder %s19, 1
        %s228 = scalar_select %p227, %s19, 1
        %p229 = scmp.lt.s32.totalorder %s226, 1
        %s230 = scalar_select %p229, %s226, 1
        %s231 = smul.addr %s228, 2
        %s232 = sadd.s32 %s230, %s231
        %s233 = smul.addr %s232, 8
        %s234 = scalar_lea.vmem %s0, %s233
        %s235 = smul.u32 2, %s20
      $region36: #{tpu_custom_call.1} parent=31 // pred_fallthru
        _
      // Predicated region
      $region37: #{tpu_custom_call.1} parent=31 // pred_check
        %p236 = pneg %p74
      $region38: #{tpu_custom_call.1} parent=31 // pred_check_branch
        %238 = sbr.rel (%p236) target = $region40
      $region39: #{tpu_custom_call.1} parent=31 // pred_region
        %p239 = scmp.lt.s32.totalorder %s19, 1
        %s240 = scalar_select %p239, %s19, 1
        %p241 = scmp.lt.s32.totalorder %s20, 0
        %s242 = scalar_select %p241, %s20, 0
        %s243 = sadd.s32 %s242, %s240
        %s244 = scalar_lea.vmem %s1, %s243
      $region40: #{tpu_custom_call.1} parent=31 // pred_fallthru
        _
    $region32: #{tpu_custom_call.1} parent=5 // pred_fallthru
      _
    %p245 = scmp.le.s32.totalorder 1, %s12
    %p246 = scmp.lt.s32.totalorder %s12, 3
    %p247 = pnand %p245, %p246
    %p248 = pneg %p247
    // Predicated region
    $region41: #{tpu_custom_call.1} parent=5 // pred_check
      _
    $region42: #{tpu_custom_call.1} parent=5 // pred_check_branch
      %250 = sbr.rel (%p247) target = $region44
    $region43: #{tpu_custom_call.1} parent=5 // pred_region
      %s251 = ssub.s32 %s12, 1
      %s252 = smul.u32 2, %s22
      %p253 = scmp.lt.s32.totalorder %s21, 1
      %s254 = scalar_select %p253, %s21, 1
      %p255 = scmp.lt.s32.totalorder %s252, 1
      %s256 = scalar_select %p255, %s252, 1
      %s257 = smul.addr %s254, 2
      %s258 = sadd.s32 %s256, %s257
      %s259 = smul.addr %s258, 8
      %s260 = scalar_lea.vmem %s0, %s259
      %p261 = pneg %p52
      %p262 = pneg %p49
      %p263 = scmp.lt.s32.totalorder %s21, 1
      %s264 = scalar_select %p263, %s21, 1
      %p265 = scmp.lt.s32.totalorder %s22, 0
      %s266 = scalar_select %p265, %s22, 0
      %s267 = sadd.s32 %s266, %s264
      %s268 = scalar_lea.vmem %s1, %s267
      %p269 = pneg %p80
      %p270 = pneg %p77
      %p271 = pneg %p101
      %p272 = pneg %p98
      %p273 = pneg %p122
      %p274 = pneg %p119
      %p275 = pneg %p143
      %p276 = pneg %p140
      %p277 = pneg %p164
      %p278 = pneg %p161
      %p279 = pneg %p192
      %p280 = pneg %p189
      %p281 = scmp.lt.s32.totalorder %s21, 1
      %s282 = scalar_select %p281, %s21, 1
      %p283 = scmp.lt.s32.totalorder %s22, 0
      %s284 = scalar_select %p283, %s22, 0
      %s285 = sadd.s32 %s284, %s282
      %s286 = scalar_lea.vmem %s6, %s285
      %s287 = smul.u32 2, %s22
      %p288 = scmp.lt.s32.totalorder %s21, 1
      %s289 = scalar_select %p288, %s21, 1
      %p290 = scmp.lt.s32.totalorder %s287, 1
      %s291 = scalar_select %p290, %s287, 1
      %s292 = smul.addr %s289, 2
      %s293 = sadd.s32 %s291, %s292
      %s294 = smul.addr %s293, 8
      %s295 = scalar_lea.vmem %s0, %s294
      %s296 = smul.u32 2, %s22
      %p297 = scmp.lt.s32.totalorder %s21, 1
      %s298 = scalar_select %p297, %s21, 1
      %p299 = scmp.lt.s32.totalorder %s22, 0
      %s300 = scalar_select %p299, %s22, 0
      %s301 = sadd.s32 %s300, %s298
      %s302 = scalar_lea.vmem %s1, %s301
      %p303 = scmp.lt.s32.totalorder %s21, 1
      %s304 = scalar_select %p303, %s21, 1
      %p305 = scmp.lt.s32.totalorder %s22, 0
      %s306 = scalar_select %p305, %s22, 0
      %s307 = sadd.s32 %s306, %s304
      %s308 = scalar_lea.vmem %s6, %s307
      %v309 = vld [vmem:[%s295] sm:$0xff]
      %v310 = vld [vmem:[%s295 + $0x8] sm:$0xff]
      %v311 = vld [vmem:[%s302] sm:$0x1]
      %v312 = vrot.slane %v309, 7
      %v313 = vrot.slane %v310, 7
      %v314 = vlaneseq
      %v315 = vshrl.u32 %v314, 7
      %vm316 = vcmp.lt.s32.totalorder %v315, 1
      %v317 = vsel %vm316, %v312, %v313
      %v318 = vsel %vm316, %v313, %v312
      %v319 = vadd.s32 %v315, 8
      %vm320 = vcmp.eq.s32.totalorder %v315, 0
      %vm321 = vcmp.eq.s32.totalorder %v319, 0
      %v323 = vlaneseq
      %v324 = vshrl.u32 %v323, 7
      %v325 = vsub.s32 0, %v324
      %v326 = vrot.slane %v311, %v325
      %v328 = vsel %vm320, %v326, %v318
      %v329 = vsel %vm321, %v326, %v317
      %v330 = vsub.f32 %v309, %v328
      %v331 = vsub.f32 %v310, %v329
      %v332 = vld [vmem:[%s2] sm:$0x1]
      %v334 = vlaneseq
      %v335 = vshrl.u32 %v334, 7
      %v336 = vsub.s32 0, %v335
      %v337 = vrot.slane %v332, %v336
      %v339 = vmul.f32 %v330, %v337
      %v340 = vmul.f32 %v331, %v337
      %v341 = vmul.f32 %v339, %v339
      %v342 = vmul.f32 %v340, %v340
      %v343 = vld [vmem:[%s3] sm:$0xff]
      %v344 = vld [vmem:[%s3 + $0x8] sm:$0xff]
      %v345 = vld [vmem:[%s3 + $0x10] sm:$0xff]
      %v346 = vld [vmem:[%s3 + $0x18] sm:$0xff]
      %v347 = vld [vmem:[%s3 + $0x20] sm:$0x3]
      %vm348 = vcmask 277504
      %v350 = vsel %vm348, %v341, 0
      %v353 = vsel %vm348, %v342, 0
      %vm355 = vcmask 1041408
      %v357 = vsel %vm355, %v347, 0
      %359 = vmatprep.subr.mxu0 0.0
      %360 = vmatpush1.msra.mxu0 0.0
      %361 = vmatprep.subr.mxu0 0.0
      %362 = vmatpush1.msra.mxu0 0.0
      %363 = vmatprep.subr.mxu0 0.0
      %364 = vmatpush1.msra.mxu0 0.0
      %365 = vmatprep.subr.mxu0 0.0
      %366 = vmatpush1.msra.mxu0 0.0
      %367 = vmatprep.subr.mxu0 0.0
      %368 = vmatpush1.msra.mxu0 0.0
      %369 = vmatprep.subr.mxu0 0.0
      %370 = vmatpush1.msra.mxu0 0.0
      %371 = vmatprep.subr.mxu0 0.0
      %372 = vmatpush1.msra.mxu0 0.0
      %373 = vmatprep.subr.mxu0 0.0
      %374 = vmatpush1.msra.mxu0 0.0
      %375 = vmatprep.subr.mxu0 0.0
      %376 = vmatpush1.msra.mxu0 0.0
      %377 = vmatprep.subr.mxu0 0.0
      %378 = vmatpush1.msra.mxu0 0.0
      %379 = vmatprep.subr.mxu0 0.0
      %380 = vmatpush1.msra.mxu0 0.0
      %381 = vmatprep.subr.mxu0 0.0
      %v382 = vand.u32 %v357, 4294901760
      %383 = vmatpush1.msra.mxu0 %v382
      %384 = vmatprep.subr.mxu0 0.0
      %v385 = vand.u32 %v346, 4294901760
      %386 = vmatpush1.msra.mxu0 %v385
      %387 = vmatprep.subr.mxu0 0.0
      %v388 = vand.u32 %v345, 4294901760
      %389 = vmatpush1.msra.mxu0 %v388
      %390 = vmatprep.subr.mxu0 0.0
      %v391 = vand.u32 %v344, 4294901760
      %392 = vmatpush1.msra.mxu0 %v391
      %393 = vmatprep.subr.mxu0 0.0
      %v394 = vand.u32 %v343, 4294901760
      %395 = vmatpush1.msra.mxu0 %v394
      %396 = vmatprep.subr.mxu0 0.0
      %397 = vmatpush2.msra.mxu0 0.0
      %398 = vmatprep.subr.mxu0 0.0
      %399 = vmatpush2.msra.mxu0 0.0
      %400 = vmatprep.subr.mxu0 0.0
      %401 = vmatpush2.msra.mxu0 0.0
      %402 = vmatprep.subr.mxu0 0.0
      %403 = vmatpush2.msra.mxu0 0.0
      %404 = vmatprep.subr.mxu0 0.0
      %405 = vmatpush2.msra.mxu0 0.0
      %406 = vmatprep.subr.mxu0 0.0
      %407 = vmatpush2.msra.mxu0 0.0
      %408 = vmatprep.subr.mxu0 0.0
      %409 = vmatpush2.msra.mxu0 0.0
      %410 = vmatprep.subr.mxu0 0.0
      %411 = vmatpush2.msra.mxu0 0.0
      %412 = vmatprep.subr.mxu0 0.0
      %413 = vmatpush2.msra.mxu0 0.0
      %414 = vmatprep.subr.mxu0 0.0
      %415 = vmatpush2.msra.mxu0 0.0
      %416 = vmatprep.subr.mxu0 0.0
      %417 = vmatpush2.msra.mxu0 0.0
      %418 = vmatprep.subr.mxu0 0.0
      %419 = vmatpush2.msra.mxu0 0.0
      %420 = vmatprep.subr.mxu0 0.0
      %421 = vmatpush2.msra.mxu0 0.0
      %422 = vmatprep.subr.mxu0 0.0
      %423 = vmatpush2.msra.mxu0 0.0
      %424 = vmatprep.subr.mxu0 0.0
      %425 = vmatpush2.msra.mxu0 0.0
      %426 = vmatprep.subr.mxu0 0.0
      %427 = vmatpush2.msra.mxu0 0.0
      %428 = vmatprep.mubr.f32.mxu0 0.0
      %v429 = vand.u32 %v350, 4294901760
      %v430 = vsub.f32 %v350, %v429
      %v431 = vand.u32 %v430, 4294901760
      %v432 = vsub.f32 %v430, %v431
      %v433 = vand.u32 %v432, 4294901760
      %434 = vmatmul.mubr.f32.gmra.mxu0 %v433
      %v435 = vpop.f32.mrf.mxu0
      %v436 = vadd.f32 0.0, %v435
      %v437 = vpop.f32.mrf.mxu0
      %438 = vmatprep.mubr.f32.mxu0 0.0
      %v439 = vand.u32 %v353, 4294901760
      %v440 = vsub.f32 %v353, %v439
      %v441 = vand.u32 %v440, 4294901760
      %v442 = vsub.f32 %v440, %v441
      %v443 = vand.u32 %v442, 4294901760
      %444 = vmatmul.mubr.f32.gmra.mxu0 %v443
      %v445 = vpop.f32.mrf.mxu0
      %v446 = vadd.f32 0.0, %v445
      %v447 = vpop.f32.mrf.mxu0
      %448 = vdwg.mxu0
      %449 = vmatprep.subr.mxu0 0.0
      %450 = vmatpush1.msra.mxu0 0.0
      %451 = vmatprep.subr.mxu0 0.0
      %452 = vmatpush1.msra.mxu0 0.0
      %453 = vmatprep.subr.mxu0 0.0
      %454 = vmatpush1.msra.mxu0 0.0
      %455 = vmatprep.subr.mxu0 0.0
      %456 = vmatpush1.msra.mxu0 0.0
      %457 = vmatprep.subr.mxu0 0.0
      %458 = vmatpush1.msra.mxu0 0.0
      %459 = vmatprep.subr.mxu0 0.0
      %460 = vmatpush1.msra.mxu0 0.0
      %461 = vmatprep.subr.mxu0 0.0
      %462 = vmatpush1.msra.mxu0 0.0
      %463 = vmatprep.subr.mxu0 0.0
      %464 = vmatpush1.msra.mxu0 0.0
      %465 = vmatprep.subr.mxu0 0.0
      %466 = vmatpush1.msra.mxu0 0.0
      %467 = vmatprep.subr.mxu0 0.0
      %468 = vmatpush1.msra.mxu0 0.0
      %469 = vmatprep.subr.mxu0 0.0
      %470 = vmatpush1.msra.mxu0 0.0
      %471 = vmatprep.subr.mxu0 0.0
      %v472 = vand.u32 %v357, 4294901760
      %v473 = vsub.f32 %v357, %v472
      %v474 = vand.u32 %v473, 4294901760
      %v475 = vsub.f32 %v473, %v474
      %v476 = vand.u32 %v475, 4294901760
      %477 = vmatpush1.msra.mxu0 %v476
      %478 = vmatprep.subr.mxu0 0.0
      %v479 = vand.u32 %v346, 4294901760
      %v480 = vsub.f32 %v346, %v479
      %v481 = vand.u32 %v480, 4294901760
      %v482 = vsub.f32 %v480, %v481
      %v483 = vand.u32 %v482, 4294901760
      %484 = vmatpush1.msra.mxu0 %v483
      %485 = vmatprep.subr.mxu0 0.0
      %v486 = vand.u32 %v345, 4294901760
      %v487 = vsub.f32 %v345, %v486
      %v488 = vand.u32 %v487, 4294901760
      %v489 = vsub.f32 %v487, %v488
      %v490 = vand.u32 %v489, 4294901760
      %491 = vmatpush1.msra.mxu0 %v490
      %492 = vmatprep.subr.mxu0 0.0
      %v493 = vand.u32 %v344, 4294901760
      %v494 = vsub.f32 %v344, %v493
      %v495 = vand.u32 %v494, 4294901760
      %v496 = vsub.f32 %v494, %v495
      %v497 = vand.u32 %v496, 4294901760
      %498 = vmatpush1.msra.mxu0 %v497
      %499 = vmatprep.subr.mxu0 0.0
      %v500 = vand.u32 %v343, 4294901760
      %v501 = vsub.f32 %v343, %v500
      %v502 = vand.u32 %v501, 4294901760
      %v503 = vsub.f32 %v501, %v502
      %v504 = vand.u32 %v503, 4294901760
      %505 = vmatpush1.msra.mxu0 %v504
      %506 = vmatprep.subr.mxu0 0.0
      %507 = vmatpush2.msra.mxu0 0.0
      %508 = vmatprep.subr.mxu0 0.0
      %509 = vmatpush2.msra.mxu0 0.0
      %510 = vmatprep.subr.mxu0 0.0
      %511 = vmatpush2.msra.mxu0 0.0
      %512 = vmatprep.subr.mxu0 0.0
      %513 = vmatpush2.msra.mxu0 0.0
      %514 = vmatprep.subr.mxu0 0.0
      %515 = vmatpush2.msra.mxu0 0.0
      %516 = vmatprep.subr.mxu0 0.0
      %517 = vmatpush2.msra.mxu0 0.0
      %518 = vmatprep.subr.mxu0 0.0
      %519 = vmatpush2.msra.mxu0 0.0
      %520 = vmatprep.subr.mxu0 0.0
      %521 = vmatpush2.msra.mxu0 0.0
      %522 = vmatprep.subr.mxu0 0.0
      %523 = vmatpush2.msra.mxu0 0.0
      %524 = vmatprep.subr.mxu0 0.0
      %525 = vmatpush2.msra.mxu0 0.0
      %526 = vmatprep.subr.mxu0 0.0
      %527 = vmatpush2.msra.mxu0 0.0
      %528 = vmatprep.subr.mxu0 0.0
      %529 = vmatpush2.msra.mxu0 0.0
      %530 = vmatprep.subr.mxu0 0.0
      %531 = vmatpush2.msra.mxu0 0.0
      %532 = vmatprep.subr.mxu0 0.0
      %533 = vmatpush2.msra.mxu0 0.0
      %534 = vmatprep.subr.mxu0 0.0
      %535 = vmatpush2.msra.mxu0 0.0
      %536 = vmatprep.subr.mxu0 0.0
      %537 = vmatpush2.msra.mxu0 0.0
      %538 = vmatprep.mubr.f32.mxu0 0.0
      %v539 = vand.u32 %v350, 4294901760
      %540 = vmatmul.mubr.f32.gmra.mxu0 %v539
      %v541 = vpop.f32.mrf.mxu0
      %v542 = vadd.f32 %v436, %v541
      %v543 = vpop.f32.mrf.mxu0
      %544 = vmatprep.mubr.f32.mxu0 0.0
      %v545 = vand.u32 %v353, 4294901760
      %546 = vmatmul.mubr.f32.gmra.mxu0 %v545
      %v547 = vpop.f32.mrf.mxu0
      %v548 = vadd.f32 %v446, %v547
      %v549 = vpop.f32.mrf.mxu0
      %550 = vdwg.mxu0
      %551 = vmatprep.subr.mxu0 0.0
      %552 = vmatpush1.msra.mxu0 0.0
      %553 = vmatprep.subr.mxu0 0.0
      %554 = vmatpush1.msra.mxu0 0.0
      %555 = vmatprep.subr.mxu0 0.0
      %556 = vmatpush1.msra.mxu0 0.0
      %557 = vmatprep.subr.mxu0 0.0
      %558 = vmatpush1.msra.mxu0 0.0
      %559 = vmatprep.subr.mxu0 0.0
      %560 = vmatpush1.msra.mxu0 0.0
      %561 = vmatprep.subr.mxu0 0.0
      %562 = vmatpush1.msra.mxu0 0.0
      %563 = vmatprep.subr.mxu0 0.0
      %564 = vmatpush1.msra.mxu0 0.0
      %565 = vmatprep.subr.mxu0 0.0
      %566 = vmatpush1.msra.mxu0 0.0
      %567 = vmatprep.subr.mxu0 0.0
      %568 = vmatpush1.msra.mxu0 0.0
      %569 = vmatprep.subr.mxu0 0.0
      %570 = vmatpush1.msra.mxu0 0.0
      %571 = vmatprep.subr.mxu0 0.0
      %572 = vmatpush1.msra.mxu0 0.0
      %573 = vmatprep.subr.mxu0 0.0
      %v574 = vand.u32 %v357, 4294901760
      %v575 = vsub.f32 %v357, %v574
      %576 = vmatpush1.msra.mxu0 %v575
      %577 = vmatprep.subr.mxu0 0.0
      %v578 = vand.u32 %v346, 4294901760
      %v579 = vsub.f32 %v346, %v578
      %580 = vmatpush1.msra.mxu0 %v579
      %581 = vmatprep.subr.mxu0 0.0
      %v582 = vand.u32 %v345, 4294901760
      %v583 = vsub.f32 %v345, %v582
      %584 = vmatpush1.msra.mxu0 %v583
      %585 = vmatprep.subr.mxu0 0.0
      %v586 = vand.u32 %v344, 4294901760
      %v587 = vsub.f32 %v344, %v586
      %588 = vmatpush1.msra.mxu0 %v587
      %589 = vmatprep.subr.mxu0 0.0
      %v590 = vand.u32 %v343, 4294901760
      %v591 = vsub.f32 %v343, %v590
      %592 = vmatpush1.msra.mxu0 %v591
      %593 = vmatprep.subr.mxu0 0.0
      %594 = vmatpush2.msra.mxu0 0.0
      %595 = vmatprep.subr.mxu0 0.0
      %596 = vmatpush2.msra.mxu0 0.0
      %597 = vmatprep.subr.mxu0 0.0
      %598 = vmatpush2.msra.mxu0 0.0
      %599 = vmatprep.subr.mxu0 0.0
      %600 = vmatpush2.msra.mxu0 0.0
      %601 = vmatprep.subr.mxu0 0.0
      %602 = vmatpush2.msra.mxu0 0.0
      %603 = vmatprep.subr.mxu0 0.0
      %604 = vmatpush2.msra.mxu0 0.0
      %605 = vmatprep.subr.mxu0 0.0
      %606 = vmatpush2.msra.mxu0 0.0
      %607 = vmatprep.subr.mxu0 0.0
      %608 = vmatpush2.msra.mxu0 0.0
      %609 = vmatprep.subr.mxu0 0.0
      %610 = vmatpush2.msra.mxu0 0.0
      %611 = vmatprep.subr.mxu0 0.0
      %612 = vmatpush2.msra.mxu0 0.0
      %613 = vmatprep.subr.mxu0 0.0
      %614 = vmatpush2.msra.mxu0 0.0
      %615 = vmatprep.subr.mxu0 0.0
      %616 = vmatpush2.msra.mxu0 0.0
      %617 = vmatprep.subr.mxu0 0.0
      %618 = vmatpush2.msra.mxu0 0.0
      %619 = vmatprep.subr.mxu0 0.0
      %620 = vmatpush2.msra.mxu0 0.0
      %621 = vmatprep.subr.mxu0 0.0
      %622 = vmatpush2.msra.mxu0 0.0
      %623 = vmatprep.subr.mxu0 0.0
      %624 = vmatpush2.msra.mxu0 0.0
      %625 = vmatprep.mubr.f32.mxu0 0.0
      %v626 = vand.u32 %v350, 4294901760
      %v627 = vsub.f32 %v350, %v626
      %628 = vmatmul.mubr.f32.gmra.mxu0 %v627
      %v629 = vpop.f32.mrf.mxu0
      %v630 = vadd.f32 %v542, %v629
      %v631 = vpop.f32.mrf.mxu0
      %632 = vmatprep.mubr.f32.mxu0 0.0
      %v633 = vand.u32 %v353, 4294901760
      %v634 = vsub.f32 %v353, %v633
      %635 = vmatmul.mubr.f32.gmra.mxu0 %v634
      %v636 = vpop.f32.mrf.mxu0
      %v637 = vadd.f32 %v548, %v636
      %v638 = vpop.f32.mrf.mxu0
      %639 = vdwg.mxu0
      %640 = vmatprep.subr.mxu0 0.0
      %641 = vmatpush1.msra.mxu0 0.0
      %642 = vmatprep.subr.mxu0 0.0
      %643 = vmatpush1.msra.mxu0 0.0
      %644 = vmatprep.subr.mxu0 0.0
      %645 = vmatpush1.msra.mxu0 0.0
      %646 = vmatprep.subr.mxu0 0.0
      %647 = vmatpush1.msra.mxu0 0.0
      %648 = vmatprep.subr.mxu0 0.0
      %649 = vmatpush1.msra.mxu0 0.0
      %650 = vmatprep.subr.mxu0 0.0
      %651 = vmatpush1.msra.mxu0 0.0
      %652 = vmatprep.subr.mxu0 0.0
      %653 = vmatpush1.msra.mxu0 0.0
      %654 = vmatprep.subr.mxu0 0.0
      %655 = vmatpush1.msra.mxu0 0.0
      %656 = vmatprep.subr.mxu0 0.0
      %657 = vmatpush1.msra.mxu0 0.0
      %658 = vmatprep.subr.mxu0 0.0
      %659 = vmatpush1.msra.mxu0 0.0
      %660 = vmatprep.subr.mxu0 0.0
      %661 = vmatpush1.msra.mxu0 0.0
      %662 = vmatprep.subr.mxu0 0.0
      %v663 = vand.u32 %v357, 4294901760
      %664 = vmatpush1.msra.mxu0 %v663
      %665 = vmatprep.subr.mxu0 0.0
      %v666 = vand.u32 %v346, 4294901760
      %667 = vmatpush1.msra.mxu0 %v666
      %668 = vmatprep.subr.mxu0 0.0
      %v669 = vand.u32 %v345, 4294901760
      %670 = vmatpush1.msra.mxu0 %v669
      %671 = vmatprep.subr.mxu0 0.0
      %v672 = vand.u32 %v344, 4294901760
      %673 = vmatpush1.msra.mxu0 %v672
      %674 = vmatprep.subr.mxu0 0.0
      %v675 = vand.u32 %v343, 4294901760
      %676 = vmatpush1.msra.mxu0 %v675
      %677 = vmatprep.subr.mxu0 0.0
      %678 = vmatpush2.msra.mxu0 0.0
      %679 = vmatprep.subr.mxu0 0.0
      %680 = vmatpush2.msra.mxu0 0.0
      %681 = vmatprep.subr.mxu0 0.0
      %682 = vmatpush2.msra.mxu0 0.0
      %683 = vmatprep.subr.mxu0 0.0
      %684 = vmatpush2.msra.mxu0 0.0
      %685 = vmatprep.subr.mxu0 0.0
      %686 = vmatpush2.msra.mxu0 0.0
      %687 = vmatprep.subr.mxu0 0.0
      %688 = vmatpush2.msra.mxu0 0.0
      %689 = vmatprep.subr.mxu0 0.0
      %690 = vmatpush2.msra.mxu0 0.0
      %691 = vmatprep.subr.mxu0 0.0
      %692 = vmatpush2.msra.mxu0 0.0
      %693 = vmatprep.subr.mxu0 0.0
      %694 = vmatpush2.msra.mxu0 0.0
      %695 = vmatprep.subr.mxu0 0.0
      %696 = vmatpush2.msra.mxu0 0.0
      %697 = vmatprep.subr.mxu0 0.0
      %698 = vmatpush2.msra.mxu0 0.0
      %699 = vmatprep.subr.mxu0 0.0
      %700 = vmatpush2.msra.mxu0 0.0
      %701 = vmatprep.subr.mxu0 0.0
      %702 = vmatpush2.msra.mxu0 0.0
      %703 = vmatprep.subr.mxu0 0.0
      %704 = vmatpush2.msra.mxu0 0.0
      %705 = vmatprep.subr.mxu0 0.0
      %706 = vmatpush2.msra.mxu0 0.0
      %707 = vmatprep.subr.mxu0 0.0
      %708 = vmatpush2.msra.mxu0 0.0
      %709 = vmatprep.mubr.f32.mxu0 0.0
      %v710 = vand.u32 %v350, 4294901760
      %v711 = vsub.f32 %v350, %v710
      %v712 = vand.u32 %v711, 4294901760
      %713 = vmatmul.mubr.f32.gmra.mxu0 %v712
      %v714 = vpop.f32.mrf.mxu0
      %v715 = vadd.f32 %v630, %v714
      %v716 = vpop.f32.mrf.mxu0
      %717 = vmatprep.mubr.f32.mxu0 0.0
      %v718 = vand.u32 %v353, 4294901760
      %v719 = vsub.f32 %v353, %v718
      %v720 = vand.u32 %v719, 4294901760
      %721 = vmatmul.mubr.f32.gmra.mxu0 %v720
      %v722 = vpop.f32.mrf.mxu0
      %v723 = vadd.f32 %v637, %v722
      %v724 = vpop.f32.mrf.mxu0
      %725 = vdwg.mxu0
      %726 = vmatprep.subr.mxu0 0.0
      %727 = vmatpush1.msra.mxu0 0.0
      %728 = vmatprep.subr.mxu0 0.0
      %729 = vmatpush1.msra.mxu0 0.0
      %730 = vmatprep.subr.mxu0 0.0
      %731 = vmatpush1.msra.mxu0 0.0
      %732 = vmatprep.subr.mxu0 0.0
      %733 = vmatpush1.msra.mxu0 0.0
      %734 = vmatprep.subr.mxu0 0.0
      %735 = vmatpush1.msra.mxu0 0.0
      %736 = vmatprep.subr.mxu0 0.0
      %737 = vmatpush1.msra.mxu0 0.0
      %738 = vmatprep.subr.mxu0 0.0
      %739 = vmatpush1.msra.mxu0 0.0
      %740 = vmatprep.subr.mxu0 0.0
      %741 = vmatpush1.msra.mxu0 0.0
      %742 = vmatprep.subr.mxu0 0.0
      %743 = vmatpush1.msra.mxu0 0.0
      %744 = vmatprep.subr.mxu0 0.0
      %745 = vmatpush1.msra.mxu0 0.0
      %746 = vmatprep.subr.mxu0 0.0
      %747 = vmatpush1.msra.mxu0 0.0
      %748 = vmatprep.subr.mxu0 0.0
      %v749 = vand.u32 %v357, 4294901760
      %v750 = vsub.f32 %v357, %v749
      %v751 = vand.u32 %v750, 4294901760
      %752 = vmatpush1.msra.mxu0 %v751
      %753 = vmatprep.subr.mxu0 0.0
      %v754 = vand.u32 %v346, 4294901760
      %v755 = vsub.f32 %v346, %v754
      %v756 = vand.u32 %v755, 4294901760
      %757 = vmatpush1.msra.mxu0 %v756
      %758 = vmatprep.subr.mxu0 0.0
      %v759 = vand.u32 %v345, 4294901760
      %v760 = vsub.f32 %v345, %v759
      %v761 = vand.u32 %v760, 4294901760
      %762 = vmatpush1.msra.mxu0 %v761
      %763 = vmatprep.subr.mxu0 0.0
      %v764 = vand.u32 %v344, 4294901760
      %v765 = vsub.f32 %v344, %v764
      %v766 = vand.u32 %v765, 4294901760
      %767 = vmatpush1.msra.mxu0 %v766
      %768 = vmatprep.subr.mxu0 0.0
      %v769 = vand.u32 %v343, 4294901760
      %v770 = vsub.f32 %v343, %v769
      %v771 = vand.u32 %v770, 4294901760
      %772 = vmatpush1.msra.mxu0 %v771
      %773 = vmatprep.subr.mxu0 0.0
      %774 = vmatpush2.msra.mxu0 0.0
      %775 = vmatprep.subr.mxu0 0.0
      %776 = vmatpush2.msra.mxu0 0.0
      %777 = vmatprep.subr.mxu0 0.0
      %778 = vmatpush2.msra.mxu0 0.0
      %779 = vmatprep.subr.mxu0 0.0
      %780 = vmatpush2.msra.mxu0 0.0
      %781 = vmatprep.subr.mxu0 0.0
      %782 = vmatpush2.msra.mxu0 0.0
      %783 = vmatprep.subr.mxu0 0.0
      %784 = vmatpush2.msra.mxu0 0.0
      %785 = vmatprep.subr.mxu0 0.0
      %786 = vmatpush2.msra.mxu0 0.0
      %787 = vmatprep.subr.mxu0 0.0
      %788 = vmatpush2.msra.mxu0 0.0
      %789 = vmatprep.subr.mxu0 0.0
      %790 = vmatpush2.msra.mxu0 0.0
      %791 = vmatprep.subr.mxu0 0.0
      %792 = vmatpush2.msra.mxu0 0.0
      %793 = vmatprep.subr.mxu0 0.0
      %794 = vmatpush2.msra.mxu0 0.0
      %795 = vmatprep.subr.mxu0 0.0
      %796 = vmatpush2.msra.mxu0 0.0
      %797 = vmatprep.subr.mxu0 0.0
      %798 = vmatpush2.msra.mxu0 0.0
      %799 = vmatprep.subr.mxu0 0.0
      %800 = vmatpush2.msra.mxu0 0.0
      %801 = vmatprep.subr.mxu0 0.0
      %802 = vmatpush2.msra.mxu0 0.0
      %803 = vmatprep.subr.mxu0 0.0
      %804 = vmatpush2.msra.mxu0 0.0
      %805 = vmatprep.mubr.f32.mxu0 0.0
      %v806 = vand.u32 %v350, 4294901760
      %807 = vmatmul.mubr.f32.gmra.mxu0 %v806
      %v808 = vpop.f32.mrf.mxu0
      %v809 = vadd.f32 %v715, %v808
      %v810 = vpop.f32.mrf.mxu0
      %811 = vmatprep.mubr.f32.mxu0 0.0
      %v812 = vand.u32 %v353, 4294901760
      %813 = vmatmul.mubr.f32.gmra.mxu0 %v812
      %v814 = vpop.f32.mrf.mxu0
      %v815 = vadd.f32 %v723, %v814
      %v816 = vpop.f32.mrf.mxu0
      %817 = vdwg.mxu0
      %818 = vmatprep.subr.mxu0 0.0
      %819 = vmatpush1.msra.mxu0 0.0
      %820 = vmatprep.subr.mxu0 0.0
      %821 = vmatpush1.msra.mxu0 0.0
      %822 = vmatprep.subr.mxu0 0.0
      %823 = vmatpush1.msra.mxu0 0.0
      %824 = vmatprep.subr.mxu0 0.0
      %825 = vmatpush1.msra.mxu0 0.0
      %826 = vmatprep.subr.mxu0 0.0
      %827 = vmatpush1.msra.mxu0 0.0
      %828 = vmatprep.subr.mxu0 0.0
      %829 = vmatpush1.msra.mxu0 0.0
      %830 = vmatprep.subr.mxu0 0.0
      %831 = vmatpush1.msra.mxu0 0.0
      %832 = vmatprep.subr.mxu0 0.0
      %833 = vmatpush1.msra.mxu0 0.0
      %834 = vmatprep.subr.mxu0 0.0
      %835 = vmatpush1.msra.mxu0 0.0
      %836 = vmatprep.subr.mxu0 0.0
      %837 = vmatpush1.msra.mxu0 0.0
      %838 = vmatprep.subr.mxu0 0.0
      %839 = vmatpush1.msra.mxu0 0.0
      %840 = vmatprep.subr.mxu0 0.0
      %v841 = vand.u32 %v357, 4294901760
      %842 = vmatpush1.msra.mxu0 %v841
      %843 = vmatprep.subr.mxu0 0.0
      %v844 = vand.u32 %v346, 4294901760
      %845 = vmatpush1.msra.mxu0 %v844
      %846 = vmatprep.subr.mxu0 0.0
      %v847 = vand.u32 %v345, 4294901760
      %848 = vmatpush1.msra.mxu0 %v847
      %849 = vmatprep.subr.mxu0 0.0
      %v850 = vand.u32 %v344, 4294901760
      %851 = vmatpush1.msra.mxu0 %v850
      %852 = vmatprep.subr.mxu0 0.0
      %v853 = vand.u32 %v343, 4294901760
      %854 = vmatpush1.msra.mxu0 %v853
      %855 = vmatprep.subr.mxu0 0.0
      %856 = vmatpush2.msra.mxu0 0.0
      %857 = vmatprep.subr.mxu0 0.0
      %858 = vmatpush2.msra.mxu0 0.0
      %859 = vmatprep.subr.mxu0 0.0
      %860 = vmatpush2.msra.mxu0 0.0
      %861 = vmatprep.subr.mxu0 0.0
      %862 = vmatpush2.msra.mxu0 0.0
      %863 = vmatprep.subr.mxu0 0.0
      %864 = vmatpush2.msra.mxu0 0.0
      %865 = vmatprep.subr.mxu0 0.0
      %866 = vmatpush2.msra.mxu0 0.0
      %867 = vmatprep.subr.mxu0 0.0
      %868 = vmatpush2.msra.mxu0 0.0
      %869 = vmatprep.subr.mxu0 0.0
      %870 = vmatpush2.msra.mxu0 0.0
      %871 = vmatprep.subr.mxu0 0.0
      %872 = vmatpush2.msra.mxu0 0.0
      %873 = vmatprep.subr.mxu0 0.0
      %874 = vmatpush2.msra.mxu0 0.0
      %875 = vmatprep.subr.mxu0 0.0
      %876 = vmatpush2.msra.mxu0 0.0
      %877 = vmatprep.subr.mxu0 0.0
      %878 = vmatpush2.msra.mxu0 0.0
      %879 = vmatprep.subr.mxu0 0.0
      %880 = vmatpush2.msra.mxu0 0.0
      %881 = vmatprep.subr.mxu0 0.0
      %882 = vmatpush2.msra.mxu0 0.0
      %883 = vmatprep.subr.mxu0 0.0
      %884 = vmatpush2.msra.mxu0 0.0
      %885 = vmatprep.subr.mxu0 0.0
      %886 = vmatpush2.msra.mxu0 0.0
      %887 = vmatprep.mubr.f32.mxu0 0.0
      %v888 = vand.u32 %v350, 4294901760
      %889 = vmatmul.mubr.f32.gmra.mxu0 %v888
      %v890 = vpop.f32.mrf.mxu0
      %v891 = vadd.f32 %v809, %v890
      %v892 = vpop.f32.mrf.mxu0
      %893 = vmatprep.mubr.f32.mxu0 0.0
      %v894 = vand.u32 %v353, 4294901760
      %895 = vmatmul.mubr.f32.gmra.mxu0 %v894
      %v896 = vpop.f32.mrf.mxu0
      %v897 = vadd.f32 %v815, %v896
      %v898 = vpop.f32.mrf.mxu0
      %899 = vdwg.mxu0
      %v900 = vld [vmem:[%s4] sm:$0x1]
      %v902 = vlaneseq
      %v903 = vshrl.u32 %v902, 7
      %v904 = vsub.s32 0, %v903
      %v905 = vrot.slane %v900, %v904
      %906 = vrot.lane.b32.xlu0 %v905, 27
      %v907 = vpop.permute.xlu0 %906
      %v909 = vmul.f32 %v309, %v907
      %v910 = vmul.f32 %v310, %v907
      %v911 = vld [vmem:[%s5] sm:$0x1]
      %v913 = vlaneseq
      %v914 = vshrl.u32 %v913, 7
      %v915 = vsub.s32 0, %v914
      %v916 = vrot.slane %v911, %v915
      %917 = vrot.lane.b32.xlu0 %v916, 27
      %v918 = vpop.permute.xlu0 %917
      %v920 = vadd.f32 %v909, %v918
      %v921 = vadd.f32 %v910, %v918
      %v922 = vand.u32 2147483647, %v920
      %v923 = vand.u32 2147483647, %v921
      %s924 = smul.u32 %s22, 16
      %v925 = vstv %s924
      %v926 = vadd.s32 %v925, %v315
      %v927 = vadd.s32 %v925, %v319
      %vm928 = vcmp.lt.s32.totalorder %v926, 16
      %vm929 = vcmp.lt.s32.totalorder %v927, 16
      %932 = vrot.lane.b32.xlu0 %v891, 27
      %v933 = vpop.permute.xlu0 %932
      %934 = vrot.lane.b32.xlu0 %v897, 27
      %v935 = vpop.permute.xlu0 %934
      %v938 = vmul.f32 %v922, %v933
      %v939 = vmul.f32 %v923, %v935
      %v940 = vsel %vm928, %v938, 0.0
      %v941 = vsel %vm929, %v939, 0.0
      %944 = vrot.lane.b32.xlu0 %v940, 101
      %v945 = vpop.permute.xlu0 %944
      %946 = vrot.lane.b32.xlu0 %v941, 101
      %v947 = vpop.permute.xlu0 %946
      %vm950 = vcmask 31744
      %v951 = vsel %vm950, %v945, 0.0
      %952 = vadd.xlane.f32.xlu0 %v951
      %v953 = vpop.xlane.xlu0 %952
      %v954 = vsel %vm950, %v947, 0.0
      %955 = vadd.xlane.f32.xlu0 %v954
      %v956 = vpop.xlane.xlu0 %955
      %v957 = vadd.f32 %v953, %v956
      %v958 = vrot.slane %v957, 4
      %v959 = vadd.f32 %v957, %v958
      %v960 = vrot.slane %v959, 2
      %v961 = vadd.f32 %v959, %v960
      %v962 = vrot.slane %v961, 1
      %v963 = vadd.f32 %v961, %v962
      %vm964 = vcmask 0
      %965 = vst.msk [vmem:[%s308] sm:$0x1] %vm964, %v963
      %p966 = scmp.lt.s32.totalorder %s21, 1
      %s967 = scalar_select %p966, %s21, 1
      %p968 = scmp.lt.s32.totalorder %s22, 0
      %s969 = scalar_select %p968, %s22, 0
      %s970 = sadd.s32 %s969, %s967
      %s971 = scalar_lea.vmem %s6, %s970
      // Predicated region
      $region45: #{tpu_custom_call.1} parent=43 // pred_check
        %p972 = pneg %p189
      $region46: #{tpu_custom_call.1} parent=43 // pred_check_branch
        %974 = sbr.rel (%p972) target = $region48
      $region47: #{tpu_custom_call.1} parent=43 // pred_region
        _
      $region48: #{tpu_custom_call.1} parent=43 // pred_fallthru
        _
    $region44: #{tpu_custom_call.1} parent=5 // pred_fallthru
      _
    %p975 = scmp.le.s32.totalorder 2, %s12
    // Predicated region
    $region49: #{tpu_custom_call.1} parent=5 // pred_check
      %p976 = pneg %p975
    $region50: #{tpu_custom_call.1} parent=5 // pred_check_branch
      %978 = sbr.rel (%p976) target = $region52
    $region51: #{tpu_custom_call.1} parent=5 // pred_region
      %s979 = ssub.s32 %s12, 2
      // Predicated region
      $region53: #{tpu_custom_call.1} parent=51 // pred_check
        %p980 = pneg %p195
      $region54: #{tpu_custom_call.1} parent=51 // pred_check_branch
        %982 = sbr.rel (%p980) target = $region56
      $region55: #{tpu_custom_call.1} parent=51 // pred_region
        %p983 = scmp.lt.s32.totalorder %s23, 1
        %s984 = scalar_select %p983, %s23, 1
        %p985 = scmp.lt.s32.totalorder %s24, 0
        %s986 = scalar_select %p985, %s24, 0
        %s987 = sadd.s32 %s986, %s984
        %s988 = scalar_lea.vmem %s6, %s987
      $region56: #{tpu_custom_call.1} parent=51 // pred_fallthru
        _
    $region52: #{tpu_custom_call.1} parent=5 // pred_fallthru
      _
  $region6: #{tpu_custom_call.1} parent=0 // loop_footer
    %s16 = sadd.s32 1, %s12
  $region7: #{tpu_custom_call.1} parent=0 // loop_footer_branch
    %11 = sbr.rel target = $region3
  $region8: #{tpu_custom_call.1} parent=0 // loop_exit
    _

</llo_original>
